<compile_context>
chip_gen: v6e
topology: v6e:2x2x1
jax: 0.10.0
libtpu: 0.0.40
codegen_flags: <defaults>
</compile_context>

<pallas_src>
import functools

import jax
import jax.numpy as jnp
from jax import lax
from jax.experimental import pallas as pl
from jax.experimental.pallas import tpu as pltpu

BN_EPS = 1e-5
LEAKY_SLOPE = 0.1


def _round_up(x, m):
    return (x + m - 1) // m * m


def _vmem_budget_bytes():
    """Usable VMEM budget derived from the actual chip (v7x: 64 MiB phys)."""
    cap = 64 << 20  # conservative default (v7x)
    try:
        info = pltpu.get_tpu_info()
        cap = int(getattr(info, "vmem_capacity_bytes", cap))
    except Exception:
        pass
    # Headroom for Mosaic internal scratch; no point asking for >100 MiB.
    return int(max(min(cap - (12 << 20), 100 << 20), 16 << 20))


def _vmem_limit(need, budget):
    return int(min(budget, max(need + (8 << 20), 32 << 20)))


# ---------------------------------------------------------------------------
# Pallas kernels
# ---------------------------------------------------------------------------
def _fused_conv_bn_leaky_kernel(w_ref, p_ref, gamma_ref, beta_ref, out_ref,
                                sum_ref, sq_ref, *, grid_m, m_true):
    """Single-pass conv(matmul) + global-batch BN + LeakyReLU(0.1).

    w_ref:     (Cout, Kp)           compute-dtype reshaped conv weight
    p_ref:     (Kp, TILE_M)         compute-dtype im2col patches (M-tiled)
    gamma_ref: (Cout, 1) f32        BN weight
    beta_ref:  (Cout, 1) f32        BN bias
    out_ref:   (grid_m, Cout, TILE_M) f32  resident output (constant index map)
    sum_ref/sq_ref: (Cout, 1) f32   running per-channel sum / sum-of-squares
    """
    i = pl.program_id(0)

    @pl.when(i == 0)
    def _init():
        sum_ref[...] = jnp.zeros_like(sum_ref)
        sq_ref[...] = jnp.zeros_like(sq_ref)

    y = jnp.dot(w_ref[...], p_ref[...], preferred_element_type=jnp.float32)
    out_ref[i] = y                                       # lane-dense (Cout, TILE_M)
    sum_ref[...] += jnp.sum(y, axis=1, keepdims=True)
    sq_ref[...] += jnp.sum(y * y, axis=1, keepdims=True)
    # Zero-padded M columns contribute exactly 0 (no conv bias on the BN path),
    # so dividing by the true M below gives PyTorch-exact batch statistics.

    @pl.when(i == grid_m - 1)
    def _finalize():
        inv_m = 1.0 / m_true
        mean = sum_ref[...] * inv_m
        # E[x^2]-E[x]^2 in f32; fine for conv activations (near-zero mean).
        var = jnp.maximum(sq_ref[...] * inv_m - mean * mean, 0.0)
        scale = gamma_ref[...] * lax.rsqrt(var + BN_EPS)
        shift = beta_ref[...] - mean * scale

        def apply_tile(j, carry):
            z = out_ref[j] * scale + shift
            out_ref[j] = jnp.where(z >= 0, z, LEAKY_SLOPE * z)
            return carry

        lax.fori_loop(0, grid_m, apply_tile, 0)


def _matmul_stats_kernel(w_ref, p_ref, y_ref, sum_ref, sq_ref):
    """Two-pass fallback, pass 1: conv matmul tile + resident sum/sumsq."""
    @pl.when(pl.program_id(0) == 0)
    def _init():
        sum_ref[...] = jnp.zeros_like(sum_ref)
        sq_ref[...] = jnp.zeros_like(sq_ref)

    y = jnp.dot(w_ref[...], p_ref[...], preferred_element_type=jnp.float32)
    y_ref[...] = y
    sum_ref[...] += jnp.sum(y, axis=1, keepdims=True)
    sq_ref[...] += jnp.sum(y * y, axis=1, keepdims=True)


def _bn_leaky_kernel(y_ref, scale_ref, shift_ref, o_ref):
    """Two-pass fallback, pass 2 (aliased onto y): y*scale + shift + LeakyReLU."""
    z = y_ref[...] * scale_ref[...] + shift_ref[...]
    o_ref[...] = jnp.where(z >= 0, z, LEAKY_SLOPE * z).astype(o_ref.dtype)


def _matmul_bias_kernel(w_ref, b_ref, p_ref, o_ref):
    """bn_act=False path: conv-as-matmul tile + bias."""
    y = jnp.dot(w_ref[...], p_ref[...], preferred_element_type=jnp.float32)
    o_ref[...] = (y + b_ref[...]).astype(o_ref.dtype)


# ---------------------------------------------------------------------------
# Glue: transposed im2col + pallas_call wrappers
# ---------------------------------------------------------------------------
def _im2col_t(x, kh, kw, stride, padding, dtype):
    """x: (N, C, H, W) -> patchesT (C*kh*kw, N*Ho*Wo) in `dtype`, plus (Ho, Wo)."""
    n, c, h, w = x.shape
    ho = (h + 2 * padding - kh) // stride + 1
    wo = (w + 2 * padding - kw) // stride + 1
    xp = jnp.pad(x.astype(dtype),
                 ((0, 0), (0, 0), (padding, padding), (padding, padding)))
    cols = []
    for i in range(kh):
        for j in range(kw):
            cols.append(
                xp[:, :, i:i + ho * stride:stride, j:j + wo * stride:stride]
            )  # (N, C, Ho, Wo)
    # (N, C, kh*kw, Ho, Wo) -> (C, kh*kw, N, Ho, Wo) -> (K, M); K ordering is
    # C-major then (kh, kw), matching weight.reshape(Cout, Cin*kh*kw).
    pt = jnp.stack(cols, axis=2)
    pt = jnp.transpose(pt, (1, 2, 0, 3, 4))
    return pt.reshape(c * kh * kw, n * ho * wo), ho, wo


@functools.partial(
    jax.jit,
    static_argnames=("stride", "padding", "bn_act", "tile_m", "compute_dtype"),
)
def cnn_block_forward(x, weight, gamma, beta, bias, *, stride, padding,
                      bn_act, tile_m=2048, compute_dtype=jnp.bfloat16):
    """Forward pass of CNNBlock.

    x:      (N, Cin, H, W)      f32, NCHW (PyTorch convention)
    weight: (Cout, Cin, kh, kw) conv weight, PyTorch layout
    gamma, beta: (Cout,)        BatchNorm affine params (bn_act=True)
    bias:   (Cout,)             conv bias (bn_act=False)
    returns (N, Cout, Ho, Wo)   f32

    compute_dtype=jnp.bfloat16 runs the MXU at native rate with f32
    accumulation (small drift vs PyTorch f32 conv); pass jnp.float32 for
    tighter numerics.
    """
    n = x.shape[0]
    cout, cin, kh, kw = weight.shape

    patches_t, ho, wo = _im2col_t(x, kh, kw, stride, padding, compute_dtype)
    k, m = patches_t.shape

    csize = jnp.dtype(compute_dtype).itemsize
    sublane = 8 * (4 // csize)            # 8 for f32, 16 for bf16
    kp = _round_up(k, sublane)            # NOT padded to 128 (perf review)

    budget = _vmem_budget_bytes()
    headroom = 8 << 20

    # ---- tile_m selection ---------------------------------------------------
    m128 = _round_up(m, 128)
    t = _round_up(max(128, min(tile_m, m128)), 128)
    if m128 >= 256:
        # Keep >= 2 grid steps: pipelining / v7x megacore have work; costs
        # ~0.35us/step on 1-TC chips.
        t = min(t, _round_up((m + 1) // 2, 128))

    w_bytes = 2 * cout * kp * csize

    def pass_need(tm):          # streaming working set (two-pass / bias path)
        return w_bytes + 2 * kp * tm * csize + 4 * cout * tm * 4

    def fused_need(tm):         # + full resident f32 output
        mp_ = _round_up(m, tm)
        return (w_bytes + 2 * kp * tm * csize + 2 * cout * tm * 4
                + 2 * cout * mp_ * 4)

    t_stream = t
    while t_stream > 128 and pass_need(t_stream) + headroom > budget:
        t_stream -= 128
    if pass_need(t_stream) + headroom > budget:
        raise ValueError(
            f"CNNBlock tile (kp={kp}, cout={cout}) does not fit the VMEM "
            f"budget of {budget} bytes even at tile_m=128.")

    use_fused = False
    t_fused = t
    if bn_act:
        while t_fused > 128 and fused_need(t_fused) + headroom > budget:
            t_fused -= 128
        use_fused = fused_need(t_fused) + headroom <= budget

    tile = t_fused if use_fused else t_stream
    mp = _round_up(m, tile)
    grid_m = mp // tile

    patches_t = jnp.pad(patches_t, ((0, kp - k), (0, mp - m)))
    w2d = jnp.pad(weight.reshape(cout, cin * kh * kw),
                  ((0, 0), (0, kp - k))).astype(compute_dtype)

    # TODO(synk): sweep pipeline_mode=pl.Buffered(3) on p_spec if pass-1 DMA is
    # exposed on v6e/v7x (low arithmetic intensity for small Cout).
    w_spec = pl.BlockSpec((cout, kp), lambda i: (0, 0))
    p_spec = pl.BlockSpec((kp, tile), lambda i: (0, i))
    y_spec = pl.BlockSpec((cout, tile), lambda i: (0, i))
    vec_spec = pl.BlockSpec((cout, 1), lambda i: (0, 0))

    if bn_act and use_fused:
        full_spec = pl.BlockSpec((grid_m, cout, tile), lambda i: (0, 0, 0))
        kern = functools.partial(_fused_conv_bn_leaky_kernel,
                                 grid_m=grid_m, m_true=m)
        out3 = pl.pallas_call(
            kern,
            out_shape=jax.ShapeDtypeStruct((grid_m, cout, tile), jnp.float32),
            grid=(grid_m,),
            in_specs=[w_spec, p_spec, vec_spec, vec_spec],
            out_specs=full_spec,
            scratch_shapes=[pltpu.VMEM((cout, 1), jnp.float32),
                            pltpu.VMEM((cout, 1), jnp.float32)],
            compiler_params=pltpu.CompilerParams(
                dimension_semantics=("arbitrary",),
                vmem_limit_bytes=_vmem_limit(fused_need(tile), budget),
            ),
            cost_estimate=pl.CostEstimate(
                flops=2 * mp * kp * cout + 10 * mp * cout,
                transcendentals=cout,
                bytes_accessed=kp * mp * csize + cout * kp * csize
                + cout * mp * 4 + 4 * cout * 4,
            ),
        )(w2d, patches_t,
          gamma.reshape(cout, 1).astype(jnp.float32),
          beta.reshape(cout, 1).astype(jnp.float32))
        out_t = jnp.transpose(out3, (1, 0, 2)).reshape(cout, mp)
    elif bn_act:
        # Two-pass fallback for outputs too large to keep resident in VMEM.
        y_t, s1, s2 = pl.pallas_call(
            _matmul_stats_kernel,
            out_shape=(jax.ShapeDtypeStruct((cout, mp), jnp.float32),
                       jax.ShapeDtypeStruct((cout, 1), jnp.float32),
                       jax.ShapeDtypeStruct((cout, 1), jnp.float32)),
            grid=(grid_m,),
            in_specs=[w_spec, p_spec],
            out_specs=(y_spec, vec_spec, vec_spec),
            compiler_params=pltpu.CompilerParams(
                dimension_semantics=("arbitrary",),
                vmem_limit_bytes=_vmem_limit(pass_need(tile), budget)),
            cost_estimate=pl.CostEstimate(
                flops=2 * mp * kp * cout + 4 * mp * cout,
                transcendentals=0,
                bytes_accessed=kp * mp * csize + cout * kp * csize
                + cout * mp * 4),
        )(w2d, patches_t)

        mean = s1[:, 0] / m
        var = jnp.maximum(s2[:, 0] / m - mean * mean, 0.0)
        scale = gamma * lax.rsqrt(var + BN_EPS)
        shift = beta - mean * scale

        out_t = pl.pallas_call(
            _bn_leaky_kernel,
            out_shape=jax.ShapeDtypeStruct((cout, mp), jnp.float32),
            grid=(grid_m,),
            in_specs=[y_spec, vec_spec, vec_spec],
            out_specs=y_spec,
            input_output_aliases={0: 0},     # overwrite y_t in place
            compiler_params=pltpu.CompilerParams(
                dimension_semantics=("parallel",),
                vmem_limit_bytes=_vmem_limit(4 * cout * tile * 4, budget)),
            cost_estimate=pl.CostEstimate(
                flops=4 * mp * cout, transcendentals=0,
                bytes_accessed=2 * cout * mp * 4 + 2 * cout * 4),
        )(y_t, scale.reshape(cout, 1), shift.reshape(cout, 1))
    else:
        out_t = pl.pallas_call(
            _matmul_bias_kernel,
            out_shape=jax.ShapeDtypeStruct((cout, mp), jnp.float32),
            grid=(grid_m,),
            in_specs=[w_spec, vec_spec, p_spec],
            out_specs=y_spec,
            compiler_params=pltpu.CompilerParams(
                dimension_semantics=("parallel",),
                vmem_limit_bytes=_vmem_limit(pass_need(tile), budget)),
            cost_estimate=pl.CostEstimate(
                flops=2 * mp * kp * cout + mp * cout,
                transcendentals=0,
                bytes_accessed=kp * mp * csize + cout * kp * csize
                + cout * 4 + cout * mp * 4),
        )(w2d, bias.reshape(cout, 1).astype(jnp.float32), patches_t)

    # TODO(synk): for stacked CNNBlocks keep the (Cout, M) layout end-to-end
    # and drop this NCHW transpose (an extra HBM round trip per block).
    out = out_t[:, :m].reshape(cout, n, ho, wo)
    return jnp.transpose(out, (1, 0, 2, 3))


# ---------------------------------------------------------------------------
# Pure-JAX reference (tolerance self-check)
# ---------------------------------------------------------------------------
def _reference(x, weight, gamma, beta, bias, *, stride, padding, bn_act):
    y = lax.conv_general_dilated(
        x, weight, window_strides=(stride, stride),
        padding=[(padding, padding), (padding, padding)],
        dimension_numbers=("NCHW", "OIHW", "NCHW"))
    if not bn_act:
        return y + bias.reshape(1, -1, 1, 1)
    mean = jnp.mean(y, axis=(0, 2, 3), keepdims=True)
    var = jnp.mean((y - mean) ** 2, axis=(0, 2, 3), keepdims=True)
    z = (gamma.reshape(1, -1, 1, 1) * (y - mean) * lax.rsqrt(var + BN_EPS)
         + beta.reshape(1, -1, 1, 1))
    return jnp.where(z >= 0, z, LEAKY_SLOPE * z)


# ---------------------------------------------------------------------------
# Main
# ---------------------------------------------------------------------------
if __name__ == "__main__":
    # CNNBlock(in_channels=4, out_channels=8, bn_act=True,
    #          kernel_size=3, stride=1, padding=1)
    N, CIN, H, W = 2, 4, 16, 16
    COUT, KH, KW = 8, 3, 3
    STRIDE, PAD = 1, 1

    key = jax.random.PRNGKey(0)
    kx, kw_, kg, kb, kbias = jax.random.split(key, 5)

    x = jax.random.normal(kx, (N, CIN, H, W), dtype=jnp.float32)
    fan_in = CIN * KH * KW
    weight = jax.random.normal(kw_, (COUT, CIN, KH, KW), jnp.float32) / jnp.sqrt(fan_in)
    gamma = 1.0 + 0.1 * jax.random.normal(kg, (COUT,), jnp.float32)
    beta = 0.1 * jax.random.normal(kb, (COUT,), jnp.float32)
    bias = 0.1 * jax.random.normal(kbias, (COUT,), jnp.float32)  # bn_act=False only

    # bn_act=True path (conv -> BN(batch stats) -> LeakyReLU), fused single call.
    out = jax.block_until_ready(
        cnn_block_forward(x, weight, gamma, beta, bias,
                          stride=STRIDE, padding=PAD, bn_act=True)
    )
    assert out.shape == (N, COUT, H, W), out.shape
    ref = _reference(x, weight, gamma, beta, bias,
                     stride=STRIDE, padding=PAD, bn_act=True)
    err = float(jnp.max(jnp.abs(out - ref)))
    assert jnp.all(jnp.isfinite(out)), "non-finite output"
    assert err < 0.1, f"bn_act=True mismatch vs reference: max abs err {err}"

    # bn_act=False path (conv + bias only)
    out2 = jax.block_until_ready(
        cnn_block_forward(x, weight, gamma, beta, bias,
                          stride=STRIDE, padding=PAD, bn_act=False)
    )
    assert out2.shape == (N, COUT, H, W), out2.shape
    ref2 = _reference(x, weight, gamma, beta, bias,
                      stride=STRIDE, padding=PAD, bn_act=False)
    err2 = float(jnp.max(jnp.abs(out2 - ref2)))
    assert err2 < 0.1, f"bn_act=False mismatch vs reference: max abs err {err2}"

    print("KERNEL_OK")
</pallas_src>

<mosaic_0001>
module attributes {stable_mosaic.version = 11 : i64} {
  func.func @_fused_conv_bn_leaky_kernel(%arg0: i32, %arg1: memref<8x48xbf16, #tpu.memory_space<vmem>>, %arg2: memref<48x256xbf16, #tpu.memory_space<vmem>>, %arg3: memref<8x1xf32, #tpu.memory_space<vmem>>, %arg4: memref<8x1xf32, #tpu.memory_space<vmem>>, %arg5: memref<2x8x256xf32, #tpu.memory_space<vmem>>, %arg6: memref<8x1xf32, #tpu.memory_space<vmem>>, %arg7: memref<8x1xf32, #tpu.memory_space<vmem>>) attributes {dimension_semantics = [#tpu.dimension_semantics<arbitrary>], iteration_bounds = array<i64: 2>, scalar_prefetch = 0 : i64, scratch_operands = 2 : i64, tpu.core_type = #tpu.core_type<tc>, window_params = [{pipeline_mode = #tpu.pipeline_mode<synchronous>, transform_indices = @transform_0, window_bounds = array<i64: 8, 48>}, {transform_indices = @transform_1, window_bounds = array<i64: 48, 256>}, {pipeline_mode = #tpu.pipeline_mode<synchronous>, transform_indices = @transform_2, window_bounds = array<i64: 8, 1>}, {pipeline_mode = #tpu.pipeline_mode<synchronous>, transform_indices = @transform_3, window_bounds = array<i64: 8, 1>}, {pipeline_mode = #tpu.pipeline_mode<synchronous>, transform_indices = @transform_4, window_bounds = array<i64: 2, 8, 256>}]} {
    %c0_i32 = arith.constant 0 : i32
    %0 = arith.cmpi eq, %arg0, %c0_i32 : i32
    %1 = arith.extui %0 : i1 to i32
    %c0_i32_0 = arith.constant 0 : i32
    %2 = arith.cmpi ne, %1, %c0_i32_0 : i32
    scf.if %2 {
      %cst_17 = arith.constant 0.000000e+00 : f32
      %24 = vector.broadcast %cst_17 : f32 to vector<8x1xf32>
      %c0_18 = arith.constant 0 : index
      %c0_19 = arith.constant 0 : index
      %25 = vector.load %arg6[%c0_18, %c0_19] : memref<8x1xf32, #tpu.memory_space<vmem>>, vector<8x1xf32>
      tpu.vector_store %arg6[%c0_18, %c0_19], %24 {strides = array<i32>} : memref<8x1xf32, #tpu.memory_space<vmem>>, vector<8x1xf32>,
      %cst_20 = arith.constant 0.000000e+00 : f32
      %26 = vector.broadcast %cst_20 : f32 to vector<8x1xf32>
      %c0_21 = arith.constant 0 : index
      %c0_22 = arith.constant 0 : index
      %27 = vector.load %arg7[%c0_21, %c0_22] : memref<8x1xf32, #tpu.memory_space<vmem>>, vector<8x1xf32>
      tpu.vector_store %arg7[%c0_21, %c0_22], %26 {strides = array<i32>} : memref<8x1xf32, #tpu.memory_space<vmem>>, vector<8x1xf32>,
    } else {
    }
    %c0 = arith.constant 0 : index
    %c0_1 = arith.constant 0 : index
    %3 = vector.load %arg1[%c0, %c0_1] : memref<8x48xbf16, #tpu.memory_space<vmem>>, vector<8x48xbf16>
    %c0_2 = arith.constant 0 : index
    %c0_3 = arith.constant 0 : index
    %4 = vector.load %arg2[%c0_2, %c0_3] : memref<48x256xbf16, #tpu.memory_space<vmem>>, vector<48x256xbf16>
    %cst = arith.constant dense<0.000000e+00> : vector<8x256xf32>
    %5 = tpu.matmul %3, %4, %cst {dimension_numbers = #tpu.dot_dimension_numbers<[1], [0], [0], [1], [0, 0, 1, 1], [], []>} : vector<8x48xbf16>, vector<48x256xbf16>, vector<8x256xf32> -> vector<8x256xf32>
    %6 = arith.index_cast %arg0 : i32 to index
    %c0_4 = arith.constant 0 : index
    %c0_5 = arith.constant 0 : index
    %7 = vector.load %arg5[%6, %c0_4, %c0_5] : memref<2x8x256xf32, #tpu.memory_space<vmem>>, vector<1x8x256xf32>
    %8 = vector.shape_cast %7 : vector<1x8x256xf32> to vector<8x256xf32>
    %9 = vector.shape_cast %5 : vector<8x256xf32> to vector<1x8x256xf32>
    tpu.vector_store %arg5[%6, %c0_4, %c0_5], %9 {strides = array<i32>} : memref<2x8x256xf32, #tpu.memory_space<vmem>>, vector<1x8x256xf32>,
    %c0_6 = arith.constant 0 : index
    %c0_7 = arith.constant 0 : index
    %10 = vector.load %arg6[%c0_6, %c0_7] : memref<8x1xf32, #tpu.memory_space<vmem>>, vector<8x1xf32>
    %cst_8 = arith.constant dense<0.000000e+00> : vector<8xf32>
    %11 = vector.multi_reduction <add>, %5, %cst_8 [1] : vector<8x256xf32> to vector<8xf32>
    %12 = vector.shape_cast %11 : vector<8xf32> to vector<8x1xf32>
    %13 = arith.addf %10, %12 : vector<8x1xf32>
    %c0_9 = arith.constant 0 : index
    %c0_10 = arith.constant 0 : index
    %14 = vector.load %arg6[%c0_9, %c0_10] : memref<8x1xf32, #tpu.memory_space<vmem>>, vector<8x1xf32>
    tpu.vector_store %arg6[%c0_9, %c0_10], %13 {strides = array<i32>} : memref<8x1xf32, #tpu.memory_space<vmem>>, vector<8x1xf32>,
    %c0_11 = arith.constant 0 : index
    %c0_12 = arith.constant 0 : index
    %15 = vector.load %arg7[%c0_11, %c0_12] : memref<8x1xf32, #tpu.memory_space<vmem>>, vector<8x1xf32>
    %16 = arith.mulf %5, %5 : vector<8x256xf32>
    %cst_13 = arith.constant dense<0.000000e+00> : vector<8xf32>
    %17 = vector.multi_reduction <add>, %16, %cst_13 [1] : vector<8x256xf32> to vector<8xf32>
    %18 = vector.shape_cast %17 : vector<8xf32> to vector<8x1xf32>
    %19 = arith.addf %15, %18 : vector<8x1xf32>
    %c0_14 = arith.constant 0 : index
    %c0_15 = arith.constant 0 : index
    %20 = vector.load %arg7[%c0_14, %c0_15] : memref<8x1xf32, #tpu.memory_space<vmem>>, vector<8x1xf32>
    tpu.vector_store %arg7[%c0_14, %c0_15], %19 {strides = array<i32>} : memref<8x1xf32, #tpu.memory_space<vmem>>, vector<8x1xf32>,
    %c1_i32 = arith.constant 1 : i32
    %21 = arith.cmpi eq, %arg0, %c1_i32 : i32
    %22 = arith.extui %21 : i1 to i32
    %c0_i32_16 = arith.constant 0 : i32
    %23 = arith.cmpi ne, %22, %c0_i32_16 : i32
    scf.if %23 {
      %c0_17 = arith.constant 0 : index
      %c0_18 = arith.constant 0 : index
      %24 = vector.load %arg6[%c0_17, %c0_18] : memref<8x1xf32, #tpu.memory_space<vmem>>, vector<8x1xf32>
      %cst_19 = arith.constant 0.001953125 : f32
      %25 = vector.broadcast %cst_19 : f32 to vector<8x1xf32>
      %26 = arith.mulf %24, %25 : vector<8x1xf32>
      %c0_20 = arith.constant 0 : index
      %c0_21 = arith.constant 0 : index
      %27 = vector.load %arg7[%c0_20, %c0_21] : memref<8x1xf32, #tpu.memory_space<vmem>>, vector<8x1xf32>
      %cst_22 = arith.constant 0.001953125 : f32
      %28 = vector.broadcast %cst_22 : f32 to vector<8x1xf32>
      %29 = arith.mulf %27, %28 : vector<8x1xf32>
      %30 = arith.mulf %26, %26 : vector<8x1xf32>
      %31 = arith.subf %29, %30 : vector<8x1xf32>
      %cst_23 = arith.constant 0.000000e+00 : f32
      %32 = vector.broadcast %cst_23 : f32 to vector<8x1xf32>
      %33 = arith.maximumf %31, %32 : vector<8x1xf32>
      %c0_24 = arith.constant 0 : index
      %c0_25 = arith.constant 0 : index
      %34 = vector.load %arg3[%c0_24, %c0_25] : memref<8x1xf32, #tpu.memory_space<vmem>>, vector<8x1xf32>
      %cst_26 = arith.constant 9.99999974E-6 : f32
      %35 = vector.broadcast %cst_26 : f32 to vector<8x1xf32>
      %36 = arith.addf %33, %35 : vector<8x1xf32>
      %37 = math.rsqrt %36 : vector<8x1xf32>
      %38 = arith.mulf %34, %37 : vector<8x1xf32>
      %c0_27 = arith.constant 0 : index
      %c0_28 = arith.constant 0 : index
      %39 = vector.load %arg4[%c0_27, %c0_28] : memref<8x1xf32, #tpu.memory_space<vmem>>, vector<8x1xf32>
      %40 = arith.mulf %26, %38 : vector<8x1xf32>
      %41 = arith.subf %39, %40 : vector<8x1xf32>
      %c0_i32_29 = arith.constant 0 : i32
      %c2_i32 = arith.constant 2 : i32
      %42 = arith.addi %c0_i32_29, %c2_i32 : i32
      %c1_i32_30 = arith.constant 1 : i32
      scf.for %arg8 = %c0_i32_29 to %42 step %c1_i32_30  : i32 {
        %43 = arith.index_cast %arg8 : i32 to index
        %c0_32 = arith.constant 0 : index
        %c0_33 = arith.constant 0 : index
        %44 = vector.load %arg5[%43, %c0_32, %c0_33] : memref<2x8x256xf32, #tpu.memory_space<vmem>>, vector<1x8x256xf32>
        %45 = vector.shape_cast %44 : vector<1x8x256xf32> to vector<8x256xf32>
        %46 = vector.broadcast %38 : vector<8x1xf32> to vector<8x256xf32>
        %47 = arith.mulf %45, %46 : vector<8x256xf32>
        %48 = vector.broadcast %41 : vector<8x1xf32> to vector<8x256xf32>
        %49 = arith.addf %47, %48 : vector<8x256xf32>
        %cst_34 = arith.constant 0.000000e+00 : f32
        %50 = vector.broadcast %cst_34 : f32 to vector<8x256xf32>
        %51 = arith.cmpf oge, %49, %50 : vector<8x256xf32>
        %cst_35 = arith.constant 1.000000e-01 : f32
        %52 = vector.broadcast %cst_35 : f32 to vector<8x256xf32>
        %53 = arith.mulf %52, %49 : vector<8x256xf32>
        %54 = arith.select %51, %49, %53 : vector<8x256xi1>, vector<8x256xf32>
        %55 = arith.index_cast %arg8 : i32 to index
        %c0_36 = arith.constant 0 : index
        %c0_37 = arith.constant 0 : index
        %56 = vector.load %arg5[%55, %c0_36, %c0_37] : memref<2x8x256xf32, #tpu.memory_space<vmem>>, vector<1x8x256xf32>
        %57 = vector.shape_cast %56 : vector<1x8x256xf32> to vector<8x256xf32>
        %58 = vector.shape_cast %54 : vector<8x256xf32> to vector<1x8x256xf32>
        tpu.vector_store %arg5[%55, %c0_36, %c0_37], %58 {strides = array<i32>} : memref<2x8x256xf32, #tpu.memory_space<vmem>>, vector<1x8x256xf32>,
      }
      %c2_i32_31 = arith.constant 2 : i32
    } else {
    }
    return
  }
  func.func @transform_0(%arg0: i32) -> (i32, i32) {
    %c0_i32 = arith.constant 0 : i32
    %c0_i32_0 = arith.constant 0 : i32
    %c0_i32_1 = arith.constant 0 : i32
    return %c0_i32, %c0_i32_0 : i32, i32
  }
  func.func @transform_1(%arg0: i32) -> (i32, i32) {
    %c0_i32 = arith.constant 0 : i32
    %c0_i32_0 = arith.constant 0 : i32
    return %c0_i32, %arg0 : i32, i32
  }
  func.func @transform_2(%arg0: i32) -> (i32, i32) {
    %c0_i32 = arith.constant 0 : i32
    %c0_i32_0 = arith.constant 0 : i32
    %c0_i32_1 = arith.constant 0 : i32
    return %c0_i32, %c0_i32_0 : i32, i32
  }
  func.func @transform_3(%arg0: i32) -> (i32, i32) {
    %c0_i32 = arith.constant 0 : i32
    %c0_i32_0 = arith.constant 0 : i32
    %c0_i32_1 = arith.constant 0 : i32
    return %c0_i32, %c0_i32_0 : i32, i32
  }
  func.func @transform_4(%arg0: i32) -> (i32, i32, i32) {
    %c0_i32 = arith.constant 0 : i32
    %c0_i32_0 = arith.constant 0 : i32
    %c0_i32_1 = arith.constant 0 : i32
    %c0_i32_2 = arith.constant 0 : i32
    return %c0_i32, %c0_i32_0, %c0_i32_1 : i32, i32, i32
  }
}

</mosaic_0001>

<llo_original>
// kernel: cnn_block_forward.1
$region0: #{cnn_block_forward.1}
  #allocation0 [shape = 'u32[]', space=smem, size = 0x4, offset = 0x4, fixed_abs, tag = 'smem constant byte address 0x4 - core index']
  #allocation1 [shape = 'u32[144,128]{1,0:T(1,128)}', space=vmem, size = 0x12000, scoped, tag = 'internal scratch']
  #allocation2 [shape = 'f32[8,1]{1,0:T(8,128)}', space=vmem, size = 0x1000, scoped, tag = 'scratch operand']
  #allocation3 [shape = 'f32[8,1]{1,0:T(8,128)}', space=vmem, size = 0x1000, scoped, tag = 'scratch operand']
  %s0 = inlined_call_operand.vmem [shape: bf16[8,48], index: 0, kind: input, shape index: {}]
  %s1 = inlined_call_operand.vmem [shape: bf16[48,512], index: 1, kind: input, shape index: {}]
  %s2 = inlined_call_operand.vmem [shape: f32[8,1], index: 2, kind: input, shape index: {}]
  %s3 = inlined_call_operand.vmem [shape: f32[8,1], index: 3, kind: input, shape index: {}]
  %s4 = inlined_call_operand.vmem [shape: f32[2,8,256], index: 4, kind: output, shape index: {}]
  %s5 = sld [smem:[#allocation0]]
  $region102: #{cnn_block_forward.1} parent=0
    _
  %s7 = ssub.s32 1, %s5
  %s8 = scalar_select 0, %s7, %s5
  $region1: #{cnn_block_forward.1} parent=0
    #allocation4 [shape = 'u8[49152]{0}', space=vmem, size = 0xc000, scoped, tag = 'input window, operand 1']
    loop: start=0, step=1, limit=4
    $region2: #{cnn_block_forward.1} parent=1 // loop_pre_header
      _
    $region3: #{cnn_block_forward.1} parent=1 // loop_header
      %s10 = sphi 0, %s14
      %p11 = scmp.ge.s32.totalorder %s10, 4
      %s18 = sphi 0, %s18
      %s20 = sphi 0, %s18
      %s21 = sphi 0, %s20
      %s35 = sphi 0, %s21
      %s41 = sphi 0, %s43
      %s44 = sphi 0, %s41
      %s45 = sphi 0, %s44
      %s61 = sphi 0, %s45
      %s65 = sphi 0, %s65
      %s67 = sphi 0, %s65
      %s68 = sphi 0, %s67
      %s82 = sphi 0, %s68
      %s86 = sphi 0, %s86
      %s88 = sphi 0, %s86
      %s89 = sphi 0, %s88
      %s103 = sphi 0, %s89
      %s107 = sphi 0, %s107
      %s109 = sphi 0, %s107
      %s110 = sphi 0, %s109
      %s124 = sphi 0, %s110
    $region4: #{cnn_block_forward.1} parent=1 // loop_header_branch
      %13 = sbr.rel (%p11) target = $region8
    $region5: #{cnn_block_forward.1} parent=1 // loop_body
      %s15 = ssub.s32 %s10, 1
      %s16 = ssub.s32 %s10, 2
      %s17 = sadd.s32 %s10, 1
      %s19 = sadd.s32 %s18, 1
      %p22 = scmp.eq.s32.totalorder %s10, 1
      %p23 = scmp.ne.s32.totalorder %s18, %s20
      %p24 = scmp.eq.s32.totalorder %s10, 0
      %p25 = por %p23, %p24
      %p26 = scmp.ne.s32.totalorder %s18, %s20
      %p27 = scmp.eq.s32.totalorder %s15, 1
      %p28 = por %p26, %p27
      %p29 = scmp.ne.s32.totalorder %s20, %s21
      %p30 = scmp.eq.s32.totalorder %s15, 0
      %p31 = por %p29, %p30
      %p32 = scmp.ne.s32.totalorder %s20, %s21
      %p33 = scmp.eq.s32.totalorder %s16, 1
      %p34 = por %p32, %p33
      %p36 = scmp.ne.s32.totalorder %s21, %s35
      %p37 = scmp.eq.s32.totalorder %s16, 0
      %p38 = por %p36, %p37
      %s39 = ssub.s32 %s10, %s17
      %p40 = scmp.eq.s32.totalorder %s39, 0
      %s42 = sadd.s32 %s41, 1
      %s43 = scalar_select %p40, %s41, %s42
      %p46 = pneg %p40
      %p47 = scmp.eq.s32.totalorder %s10, 1
      %p48 = por %p46, %p47
      %p49 = scmp.ne.s32.totalorder %s41, %s44
      %p50 = scmp.eq.s32.totalorder %s10, 0
      %p51 = por %p49, %p50
      %p52 = scmp.ne.s32.totalorder %s41, %s44
      %p53 = scmp.eq.s32.totalorder %s15, 1
      %p54 = por %p52, %p53
      %p55 = scmp.ne.s32.totalorder %s44, %s45
      %p56 = scmp.eq.s32.totalorder %s15, 0
      %p57 = por %p55, %p56
      %p58 = scmp.ne.s32.totalorder %s44, %s45
      %p59 = scmp.eq.s32.totalorder %s16, 1
      %p60 = por %p58, %p59
      %p62 = scmp.ne.s32.totalorder %s45, %s61
      %p63 = scmp.eq.s32.totalorder %s16, 0
      %p64 = por %p62, %p63
      %s66 = sadd.s32 %s65, 1
      %p69 = scmp.eq.s32.totalorder %s10, 1
      %p70 = scmp.ne.s32.totalorder %s65, %s67
      %p71 = scmp.eq.s32.totalorder %s10, 0
      %p72 = por %p70, %p71
      %p73 = scmp.ne.s32.totalorder %s65, %s67
      %p74 = scmp.eq.s32.totalorder %s15, 1
      %p75 = por %p73, %p74
      %p76 = scmp.ne.s32.totalorder %s67, %s68
      %p77 = scmp.eq.s32.totalorder %s15, 0
      %p78 = por %p76, %p77
      %p79 = scmp.ne.s32.totalorder %s67, %s68
      %p80 = scmp.eq.s32.totalorder %s16, 1
      %p81 = por %p79, %p80
      %p83 = scmp.ne.s32.totalorder %s68, %s82
      %p84 = scmp.eq.s32.totalorder %s16, 0
      %p85 = por %p83, %p84
      %s87 = sadd.s32 %s86, 1
      %p90 = scmp.eq.s32.totalorder %s10, 1
      %p91 = scmp.ne.s32.totalorder %s86, %s88
      %p92 = scmp.eq.s32.totalorder %s10, 0
      %p93 = por %p91, %p92
      %p94 = scmp.ne.s32.totalorder %s86, %s88
      %p95 = scmp.eq.s32.totalorder %s15, 1
      %p96 = por %p94, %p95
      %p97 = scmp.ne.s32.totalorder %s88, %s89
      %p98 = scmp.eq.s32.totalorder %s15, 0
      %p99 = por %p97, %p98
      %p100 = scmp.ne.s32.totalorder %s88, %s89
      %p101 = scmp.eq.s32.totalorder %s16, 1
      %p102 = por %p100, %p101
      %p104 = scmp.ne.s32.totalorder %s89, %s103
      %p105 = scmp.eq.s32.totalorder %s16, 0
      %p106 = por %p104, %p105
      %s108 = sadd.s32 %s107, 1
      %p111 = scmp.eq.s32.totalorder %s10, 1
      %p112 = scmp.ne.s32.totalorder %s107, %s109
      %p113 = scmp.eq.s32.totalorder %s10, 0
      %p114 = por %p112, %p113
      %p115 = scmp.ne.s32.totalorder %s107, %s109
      %p116 = scmp.eq.s32.totalorder %s15, 1
      %p117 = por %p115, %p116
      %p118 = scmp.ne.s32.totalorder %s109, %s110
      %p119 = scmp.eq.s32.totalorder %s15, 0
      %p120 = por %p118, %p119
      %p121 = scmp.ne.s32.totalorder %s109, %s110
      %p122 = scmp.eq.s32.totalorder %s16, 1
      %p123 = por %p121, %p122
      %p125 = scmp.ne.s32.totalorder %s110, %s124
      %p126 = scmp.eq.s32.totalorder %s16, 0
      %p127 = por %p125, %p126
      %p128 = scmp.le.s32.totalorder 1, %s10
      %p129 = scmp.lt.s32.totalorder %s10, 3
      %p130 = pnand %p128, %p129
      %p131 = pneg %p130
      // Predicated region
      $region9: #{cnn_block_forward.1} parent=5 // pred_check
        _
      $region10: #{cnn_block_forward.1} parent=5 // pred_check_branch
        %133 = sbr.rel (%p130) target = $region12
      $region11: #{cnn_block_forward.1} parent=5 // pred_region
        %s134 = ssub.s32 %s10, 1
        // Predicated region
        $region13: #{cnn_block_forward.1} parent=11 // pred_check
          %p135 = pneg %p31
        $region14: #{cnn_block_forward.1} parent=11 // pred_check_branch
          %137 = sbr.rel (%p135) target = $region16
        $region15: #{cnn_block_forward.1} parent=11 // pred_region
          _
        $region16: #{cnn_block_forward.1} parent=11 // pred_fallthru
          _
        // Predicated region
        $region17: #{cnn_block_forward.1} parent=11 // pred_check
          %p138 = pneg %p78
        $region18: #{cnn_block_forward.1} parent=11 // pred_check_branch
          %140 = sbr.rel (%p138) target = $region20
        $region19: #{cnn_block_forward.1} parent=11 // pred_region
          _
        $region20: #{cnn_block_forward.1} parent=11 // pred_fallthru
          _
        // Predicated region
        $region21: #{cnn_block_forward.1} parent=11 // pred_check
          %p141 = pneg %p99
        $region22: #{cnn_block_forward.1} parent=11 // pred_check_branch
          %143 = sbr.rel (%p141) target = $region24
        $region23: #{cnn_block_forward.1} parent=11 // pred_region
          _
        $region24: #{cnn_block_forward.1} parent=11 // pred_fallthru
          _
      $region12: #{cnn_block_forward.1} parent=5 // pred_fallthru
        _
      %p144 = scmp.lt.s32.totalorder %s10, 2
      // Predicated region
      $region25: #{cnn_block_forward.1} parent=5 // pred_check
        %p145 = pneg %p144
      $region26: #{cnn_block_forward.1} parent=5 // pred_check_branch
        %147 = sbr.rel (%p145) target = $region28
      $region27: #{cnn_block_forward.1} parent=5 // pred_region
        // Predicated region
        $region29: #{cnn_block_forward.1} parent=27 // pred_check
          %p148 = pneg %p51
        $region30: #{cnn_block_forward.1} parent=27 // pred_check_branch
          %150 = sbr.rel (%p148) target = $region32
        $region31: #{cnn_block_forward.1} parent=27 // pred_region
          %s151 = sand.u32 %s41, 1
          %s152 = sand.u32 %s41, 1
          %s153 = smul.addr %s152, 48
          %s154 = scalar_lea.vmem [#allocation4], %s153
          %s155 = smul.u32 2, %s10
          %s156 = smul.addr %s155, 4
          %s157 = scalar_lea.vmem %s1, %s156
          // Predicated region
          $region33: #{cnn_block_forward.1} parent=31 // pred_check
            _
          $region34: #{cnn_block_forward.1} parent=31 // pred_check_branch
            %159 = sbr.rel (0) target = $region36
          $region35: #{cnn_block_forward.1} parent=31 // pred_region
            // Predicated region
            $region37: #{cnn_block_forward.1} parent=35 // pred_check
              _
            $region38: #{cnn_block_forward.1} parent=35 // pred_check_branch
              %161 = sbr.rel (0) target = $region40
            $region39: #{cnn_block_forward.1} parent=35 // pred_region
              // Predicated region
              $region52: #{cnn_block_forward.1} parent=39 // pred_check
                _
              $region53: #{cnn_block_forward.1} parent=39 // pred_check_branch
                %187 = sbr.rel (0) target = $region55
              $region54: #{cnn_block_forward.1} parent=39 // pred_region
                loop: start=0, step=1, limit=1
                $region56: #{cnn_block_forward.1} parent=54 // loop_pre_header
                  _
                $region57: #{cnn_block_forward.1} parent=54 // loop_header
                  %s189 = sphi 0, %s193
                  %p190 = scmp.ge.s32.totalorder %s189, 1
                  %s194 = sphi %s157, %s157
                  %s195 = sphi %s154, %s154
                $region58: #{cnn_block_forward.1} parent=54 // loop_header_branch
                  %192 = sbr.rel (%p190) target = $region62
                $region59: #{cnn_block_forward.1} parent=54 // loop_body
                  %v196 = vld [vmem:[%s194] sm:$0xff]
                  %197 = vst [vmem:[%s195] sm:$0xff] %v196
                  %v198 = vld [vmem:[%s194 + $0x10] sm:$0xff]
                  %199 = vst [vmem:[%s195 + $0x8] sm:$0xff] %v198
                  %v200 = vld [vmem:[%s194 + $0x20] sm:$0xff]
                  %201 = vst [vmem:[%s195 + $0x10] sm:$0xff] %v200
                  %v202 = vld [vmem:[%s194 + $0x30] sm:$0xff]
                  %203 = vst [vmem:[%s195 + $0x18] sm:$0xff] %v202
                  %v204 = vld [vmem:[%s194 + $0x40] sm:$0xff]
                  %205 = vst [vmem:[%s195 + $0x20] sm:$0xff] %v204
                  %v206 = vld [vmem:[%s194 + $0x50] sm:$0xff]
                  %207 = vst [vmem:[%s195 + $0x28] sm:$0xff] %v206
                $region60: #{cnn_block_forward.1} parent=54 // loop_footer
                  %s193 = sadd.s32 1, %s189
                $region61: #{cnn_block_forward.1} parent=54 // loop_footer_branch
                  %188 = sbr.rel target = $region57
                $region62: #{cnn_block_forward.1} parent=54 // loop_exit
                  _
              $region55: #{cnn_block_forward.1} parent=39 // pred_fallthru
                _
              // Predicated region
              $region63: #{cnn_block_forward.1} parent=39 // pred_check
                _
              $region64: #{cnn_block_forward.1} parent=39 // pred_check_branch
                %209 = sbr.rel target = $region66
              $region65: #{cnn_block_forward.1} parent=39 // pred_region
                _
              $region66: #{cnn_block_forward.1} parent=39 // pred_fallthru
                _
            $region40: #{cnn_block_forward.1} parent=35 // pred_fallthru
              _
            // Predicated region
            $region41: #{cnn_block_forward.1} parent=35 // pred_check
              _
            $region42: #{cnn_block_forward.1} parent=35 // pred_check_branch
              %163 = sbr.rel target = $region44
            $region43: #{cnn_block_forward.1} parent=35 // pred_region
              %s165 = ssub.s32 256, 1
              loop: start=0, step=1, limit=1
              $region45: #{cnn_block_forward.1} parent=43 // loop_pre_header
                _
              $region46: #{cnn_block_forward.1} parent=43 // loop_header
                %s167 = sphi 0, %s171
                %p168 = scmp.ge.s32.totalorder %s167, 1
                %s172 = sphi %s157, %s157
                %s173 = sphi %s154, %s154
              $region47: #{cnn_block_forward.1} parent=43 // loop_header_branch
                %170 = sbr.rel (%p168) target = $region51
              $region48: #{cnn_block_forward.1} parent=43 // loop_body
                %v174 = vld [vmem:[%s172] sm:%s165]
                %175 = vst [vmem:[%s173] sm:%s165] %v174
                %v176 = vld [vmem:[%s172 + $0x10] sm:%s165]
                %177 = vst [vmem:[%s173 + $0x8] sm:%s165] %v176
                %v178 = vld [vmem:[%s172 + $0x20] sm:%s165]
                %179 = vst [vmem:[%s173 + $0x10] sm:%s165] %v178
                %v180 = vld [vmem:[%s172 + $0x30] sm:%s165]
                %181 = vst [vmem:[%s173 + $0x18] sm:%s165] %v180
                %v182 = vld [vmem:[%s172 + $0x40] sm:%s165]
                %183 = vst [vmem:[%s173 + $0x20] sm:%s165] %v182
                %v184 = vld [vmem:[%s172 + $0x50] sm:%s165]
                %185 = vst [vmem:[%s173 + $0x28] sm:%s165] %v184
              $region49: #{cnn_block_forward.1} parent=43 // loop_footer
                %s171 = sadd.s32 1, %s167
              $region50: #{cnn_block_forward.1} parent=43 // loop_footer_branch
                %166 = sbr.rel target = $region46
              $region51: #{cnn_block_forward.1} parent=43 // loop_exit
                _
            $region44: #{cnn_block_forward.1} parent=35 // pred_fallthru
              _
          $region36: #{cnn_block_forward.1} parent=31 // pred_fallthru
            _
          %210 = vnop
        $region32: #{cnn_block_forward.1} parent=27 // pred_fallthru
          _
      $region28: #{cnn_block_forward.1} parent=5 // pred_fallthru
        _
      %p211 = scmp.le.s32.totalorder 1, %s10
      %p212 = scmp.lt.s32.totalorder %s10, 3
      %p213 = pnand %p211, %p212
      %p214 = pneg %p213
      // Predicated region
      $region67: #{cnn_block_forward.1} parent=5 // pred_check
        _
      $region68: #{cnn_block_forward.1} parent=5 // pred_check_branch
        %216 = sbr.rel (%p213) target = $region70
      $region69: #{cnn_block_forward.1} parent=5 // pred_region
        %s217 = ssub.s32 %s10, 1
        %s218 = sand.u32 %s44, 1
        %s219 = sand.u32 %s44, 1
        %s220 = smul.addr %s219, 48
        %s221 = scalar_lea.vmem [#allocation4], %s220
        // Predicated region
        $region71: #{cnn_block_forward.1} parent=69 // pred_check
          %p222 = pneg %p57
        $region72: #{cnn_block_forward.1} parent=69 // pred_check_branch
          %224 = sbr.rel (%p222) target = $region74
        $region73: #{cnn_block_forward.1} parent=69 // pred_region
          _
        $region74: #{cnn_block_forward.1} parent=69 // pred_fallthru
          _
        %p225 = pneg %p31
        %p226 = pneg %p28
        %s227 = sand.u32 %s44, 1
        %s228 = sand.u32 %s44, 1
        %s229 = smul.addr %s228, 48
        %s230 = scalar_lea.vmem [#allocation4], %s229
        %p231 = pneg %p57
        %p232 = pneg %p54
        %p233 = pneg %p78
        %p234 = pneg %p75
        %p235 = pneg %p99
        %p236 = pneg %p96
        %p237 = pneg %p120
        %p238 = pneg %p117
        %s239 = smul.u32 2, %s15
        %p241 = scmp.eq.s32.totalorder %s15, 0
        // Predicated region
        $region75: #{cnn_block_forward.1} parent=69 // pred_check
          %p242 = pneg %p241
        $region76: #{cnn_block_forward.1} parent=69 // pred_check_branch
          %244 = sbr.rel (%p242) target = $region78
        $region77: #{cnn_block_forward.1} parent=69 // pred_region
          %vm245 = vcmask 7168
          %246 = vst.msk [vmem:[#allocation2] sm:$0xff] %vm245, 0.0
          %247 = vst.msk [vmem:[#allocation3] sm:$0xff] %vm245, 0.0
        $region78: #{cnn_block_forward.1} parent=69 // pred_fallthru
          _
        %v248 = vld [vmem:[%s0] sm:$0xf]
        %v249 = vld [vmem:[%s221] sm:$0xff]
        %v250 = vld [vmem:[%s221 + $0x8] sm:$0xff]
        %v251 = vld [vmem:[%s221 + $0x10] sm:$0xff]
        %v252 = vld [vmem:[%s221 + $0x18] sm:$0xff]
        %v253 = vld [vmem:[%s221 + $0x20] sm:$0xff]
        %v254 = vld [vmem:[%s221 + $0x28] sm:$0xff]
        %v261 = vunpack.c.l.b16 %v249
        %v262 = vunpack.c.h.b16 %v249
        %v263 = vunpack.c.l.b16 %v250
        %v264 = vunpack.c.h.b16 %v250
        %v265 = vunpack.c.l.b16 %v251
        %v266 = vunpack.c.h.b16 %v251
        %v267 = vunpack.c.l.b16 %v252
        %v268 = vunpack.c.h.b16 %v252
        %v269 = vunpack.c.l.b16 %v253
        %v270 = vunpack.c.h.b16 %v253
        %v271 = vunpack.c.l.b16 %v254
        %v272 = vunpack.c.h.b16 %v254
        %v273 = vpack.c.b16 %v263, %v261
        %v274 = vpack.c.b16 %v264, %v262
        %v275 = vpack.c.b16 %v267, %v265
        %v276 = vpack.c.b16 %v268, %v266
        %v277 = vpack.c.b16 %v271, %v269
        %v278 = vpack.c.b16 %v272, %v270
        %vm285 = vcmask 392192
        %v287 = vsel %vm285, %v248, 0
        %289 = vmatprep.subr.bf16.mxu0 0
        %290 = vmatpush1.bf16.msra.mxu0 0
        %291 = vmatprep.subr.bf16.mxu0 0
        %292 = vmatpush1.bf16.msra.mxu0 0
        %293 = vmatprep.subr.bf16.mxu0 0
        %294 = vmatpush1.bf16.msra.mxu0 0
        %295 = vmatprep.subr.bf16.mxu0 0
        %296 = vmatpush1.bf16.msra.mxu0 0
        %297 = vmatprep.subr.bf16.mxu0 0
        %298 = vmatpush1.bf16.msra.mxu0 0
        %299 = vmatprep.subr.bf16.mxu0 %v278
        %300 = vmatpush1.bf16.msra.mxu0 %v277
        %301 = vmatprep.subr.bf16.mxu0 %v276
        %302 = vmatpush1.bf16.msra.mxu0 %v275
        %303 = vmatprep.subr.bf16.mxu0 %v274
        %304 = vmatpush1.bf16.msra.mxu0 %v273
        %305 = vmatprep.subr.bf16.mxu0 0
        %306 = vmatpush2.bf16.msra.mxu0 0
        %307 = vmatprep.subr.bf16.mxu0 0
        %308 = vmatpush2.bf16.msra.mxu0 0
        %309 = vmatprep.subr.bf16.mxu0 0
        %310 = vmatpush2.bf16.msra.mxu0 0
        %311 = vmatprep.subr.bf16.mxu0 0
        %312 = vmatpush2.bf16.msra.mxu0 0
        %313 = vmatprep.subr.bf16.mxu0 0
        %314 = vmatpush2.bf16.msra.mxu0 0
        %315 = vmatprep.subr.bf16.mxu0 0
        %316 = vmatpush2.bf16.msra.mxu0 0
        %317 = vmatprep.subr.bf16.mxu0 0
        %318 = vmatpush2.bf16.msra.mxu0 0
        %319 = vmatprep.subr.bf16.mxu0 0
        %320 = vmatpush2.bf16.msra.mxu0 0
        %321 = vmatprep.mubr.bf16.mxu0 0
        %322 = vmatmul.mubr.bf16.gmra.mxu0 %v287
        %v323 = vpop.f32.mrf.mxu0
        %v324 = vadd.f32 0.0, %v323
        %v325 = vpop.f32.mrf.mxu0
        %v326 = vadd.f32 0.0, %v325
        %v327 = vpop.f32.mrf.mxu0
        %v328 = vpop.f32.mrf.mxu0
        %329 = vdwg.mxu0
        %s330 = smul.u32 %s15, 2
        %s331 = smul.addr %s330, 8
        %s332 = scalar_lea.vmem %s4, %s331
        %333 = vst [vmem:[%s332] sm:$0xff] %v324
        %334 = vst [vmem:[%s332 + $0x8] sm:$0xff] %v326
        %v335 = vld [vmem:[#allocation2] sm:$0xff]
        %v336 = vadd.f32 %v324, %v326
        %337 = vadd.xlane.f32.xlu0 %v336
        %v338 = vpop.xlane.xlu0 %337
        %v339 = vadd.f32 %v335, %v338
        %vm340 = vcmask 7168
        %341 = vst.msk [vmem:[#allocation2] sm:$0xff] %vm340, %v339
        %v342 = vld [vmem:[#allocation3] sm:$0xff]
        %v343 = vmul.f32 %v324, %v324
        %v344 = vmul.f32 %v326, %v326
        %v345 = vadd.f32 %v343, %v344
        %346 = vadd.xlane.f32.xlu0 %v345
        %v347 = vpop.xlane.xlu0 %346
        %v348 = vadd.f32 %v342, %v347
        %349 = vst.msk [vmem:[#allocation3] sm:$0xff] %vm340, %v348
        %p350 = scmp.eq.s32.totalorder %s15, 1
        // Predicated region
        $region79: #{cnn_block_forward.1} parent=69 // pred_check
          %p351 = pneg %p350
        $region80: #{cnn_block_forward.1} parent=69 // pred_check_branch
          %353 = sbr.rel (%p351) target = $region82
        $region81: #{cnn_block_forward.1} parent=69 // pred_region
          %v354 = vld [vmem:[#allocation2] sm:$0xff]
          %v355 = vmul.f32 %v354, 0.001953125
          %v356 = vld [vmem:[#allocation3] sm:$0xff]
          %v357 = vmul.f32 %v356, 0.001953125
          %v358 = vmul.f32 %v355, %v355
          %v359 = vsub.f32 %v357, %v358
          %v360 = vmax.f32 %v359, 0.0
          %v361 = vld [vmem:[%s2] sm:$0xff]
          %v362 = vadd.f32 %v360, 1e-05
          %v363 = vrsqrt.pop %v362
          %v364 = vmul.f32 %v361, %v363
          %v365 = vld [vmem:[%s3] sm:$0xff]
          %v366 = vmul.f32 %v355, %v364
          %v367 = vsub.f32 %v365, %v366
          loop: start=0, step=1, limit=2
          $region83: #{cnn_block_forward.1} parent=81 // loop_pre_header
            _
          $region84: #{cnn_block_forward.1} parent=81 // loop_header
            %s369 = sphi 0, %s373
            %p370 = scmp.ge.s32.totalorder %s369, 2
          $region85: #{cnn_block_forward.1} parent=81 // loop_header_branch
            %372 = sbr.rel (%p370) target = $region89
          $region86: #{cnn_block_forward.1} parent=81 // loop_body
            %s374 = smul.u32 %s369, 2
            %s375 = smul.addr %s374, 8
            %s376 = scalar_lea.vmem %s4, %s375
            %v377 = vld [vmem:[%s376] sm:$0xff]
            %v378 = vld [vmem:[%s376 + $0x8] sm:$0xff]
            %380 = vset.pattern.permute.xlu0 0
            %381 = vperm.xlu0 %380, %v364
            %v382 = vpop.permute.xlu0 %381
            %v384 = vmul.f32 %v377, %v382
            %v385 = vmul.f32 %v378, %v382
            %387 = vset.pattern.permute.xlu0 0
            %388 = vperm.xlu0 %387, %v367
            %v389 = vpop.permute.xlu0 %388
            %v391 = vadd.f32 %v384, %v389
            %v392 = vadd.f32 %v385, %v389
            %vm393 = vcmp.ge.f32.partialorder %v391, 0.0
            %vm394 = vcmp.ge.f32.partialorder %v392, 0.0
            %v395 = vmul.f32 %v391, 0.1
            %v396 = vmul.f32 %v392, 0.1
            %v397 = vsel %vm393, %v391, %v395
            %v398 = vsel %vm394, %v392, %v396
            %399 = vst [vmem:[%s376] sm:$0xff] %v397
            %400 = vst [vmem:[%s376 + $0x8] sm:$0xff] %v398
          $region87: #{cnn_block_forward.1} parent=81 // loop_footer
            %s373 = sadd.s32 1, %s369
          $region88: #{cnn_block_forward.1} parent=81 // loop_footer_branch
            %368 = sbr.rel target = $region84
          $region89: #{cnn_block_forward.1} parent=81 // loop_exit
            _
        $region82: #{cnn_block_forward.1} parent=69 // pred_fallthru
          _
        // Predicated region
        $region90: #{cnn_block_forward.1} parent=69 // pred_check
          %p401 = pneg %p117
        $region91: #{cnn_block_forward.1} parent=69 // pred_check_branch
          %403 = sbr.rel (%p401) target = $region93
        $region92: #{cnn_block_forward.1} parent=69 // pred_region
          _
        $region93: #{cnn_block_forward.1} parent=69 // pred_fallthru
          _
        // Predicated region
        $region94: #{cnn_block_forward.1} parent=69 // pred_check
          %p404 = pneg %p117
        $region95: #{cnn_block_forward.1} parent=69 // pred_check_branch
          %406 = sbr.rel (%p404) target = $region97
        $region96: #{cnn_block_forward.1} parent=69 // pred_region
          _
        $region97: #{cnn_block_forward.1} parent=69 // pred_fallthru
          _
      $region70: #{cnn_block_forward.1} parent=5 // pred_fallthru
        _
      %p407 = scmp.le.s32.totalorder 2, %s10
      // Predicated region
      $region98: #{cnn_block_forward.1} parent=5 // pred_check
        %p408 = pneg %p407
      $region99: #{cnn_block_forward.1} parent=5 // pred_check_branch
        %410 = sbr.rel (%p408) target = $region101
      $region100: #{cnn_block_forward.1} parent=5 // pred_region
        %s411 = ssub.s32 %s10, 2
      $region101: #{cnn_block_forward.1} parent=5 // pred_fallthru
        _
    $region6: #{cnn_block_forward.1} parent=1 // loop_footer
      %s14 = sadd.s32 1, %s10
    $region7: #{cnn_block_forward.1} parent=1 // loop_footer_branch
      %9 = sbr.rel target = $region3
    $region8: #{cnn_block_forward.1} parent=1 // loop_exit
      _

</llo_original>
